<compile_context>
chip_gen: v7x
topology: tpu7x:2x2x1
jax: 0.10.0
libtpu: 0.0.40
codegen_flags: <defaults>
</compile_context>

<pallas_src>
import functools

import jax
import jax.numpy as jnp
import numpy as np
from jax import lax
from jax.experimental import pallas as pl
from jax.experimental.pallas import tpu as pltpu

QDIM = 128        # width of the q projection (fixed by the module)
NUM_HALVES = 2    # v7x has 2 TensorCores; on v5e/v6e this is just a loop axis


def _round_up(x, m):
    return (x + m - 1) // m * m


def _bclassifier_kernel(feats_ref, w_lin_ref, w_vq_ref, qmax_ref, bias_ref,
                        a_ref, bpart_ref, dpart_ref,
                        b_acc, d_acc,
                        *, qdim, tile_n, tiles_per_half, n_valid, mask_pad):
    i = pl.program_id(1)

    @pl.when(i == 0)
    def _init():
        b_acc[...] = jnp.zeros_like(b_acc)
        d_acc[...] = jnp.zeros_like(d_acc)

    d = w_lin_ref.shape[0]
    cls = qmax_ref.shape[0]

    b_vq = bias_ref[0:1, :]           # (1, qdim + d)  == [b_q | b_v]
    b_lin = bias_ref[1:2, :d]         # (1, d)

    # lin: Linear(D, D) + ReLU   (bf16 MXU operands, f32 accumulation)
    h = jnp.dot(feats_ref[...], w_lin_ref[...],
                preferred_element_type=jnp.float32) + b_lin
    h = jnp.maximum(h, 0.0)

    # fused q/v projection of h: one MXU pass, vreg-aligned static slices.
    hv = jnp.dot(h.astype(jnp.bfloat16), w_vq_ref[...],
                 preferred_element_type=jnp.float32) + b_vq
    q = jnp.tanh(hv[:, :qdim])        # (tile_n, qdim)
    v = hv[:, qdim:]                  # (tile_n, d); Dropout(p=0.0) == identity

    # attention logits in (CLS, tile_n) orientation (no materialized transposes)
    inv_sqrt = 1.0 / float(np.sqrt(qdim))
    logits = lax.dot_general(qmax_ref[...], q.astype(jnp.bfloat16),
                             (((1,), (1,)), ((), ())),
                             preferred_element_type=jnp.float32) * inv_sqrt

    # exact softmax numerator with a static shift: both q and q_max are tanh
    # outputs so |logits| <= sqrt(qdim); no running max / tile rescale needed.
    e = jnp.exp(logits - float(np.sqrt(qdim)))          # (cls, tile_n), <= 1

    if mask_pad:
        start = (pl.program_id(0) * tiles_per_half + i) * tile_n
        col = lax.broadcasted_iota(jnp.int32, (cls, tile_n), 1) + start
        e = jnp.where(col < n_valid, e, 0.0)

    a_ref[...] = e                                               # unnormalized
    d_acc[...] += jnp.sum(e, axis=-1, keepdims=True)             # (cls, 1)
    b_acc[...] += jnp.dot(e.astype(jnp.bfloat16), v.astype(jnp.bfloat16),
                          preferred_element_type=jnp.float32)    # (cls, d)

    @pl.when(i == tiles_per_half - 1)
    def _finalize():
        bpart_ref[...] = b_acc[...][None]
        dpart_ref[...] = d_acc[...][None]


def bclassifier_forward(feats, concept, params, *, tile_n=512):
    n, d = feats.shape
    cls = concept.shape[0]
    w_lin, b_lin, w_q, b_q, w_v, b_v, w_fcc, b_fcc = params
    qdim = w_q.shape[1]

    # ---- grid-invariant operands: packed / hoisted once in the wrapper ----
    w_vq = jnp.concatenate([w_q, w_v], axis=1).astype(jnp.bfloat16)   # (d, qdim+d)
    q_max = jnp.tanh(concept @ w_q + b_q).astype(jnp.bfloat16)        # (cls, qdim)
    bias_pack = jnp.zeros((2, qdim + d), jnp.float32)
    bias_pack = bias_pack.at[0].set(jnp.concatenate([b_q, b_v]))
    bias_pack = bias_pack.at[1, :d].set(b_lin)
    w_fcc_flat = w_fcc.reshape(cls, cls * d).T                        # (cls*d, cls)

    # ---- N tiling: lane-dense A tiles require tile_n % 128 == 0 ----
    # VMEM budget per step ~ 2 x tile_n x (d bf16 + (qdim+d) f32 + cls f32);
    # 512 rows is comfortable on v5e (16 MiB scoped), v6e (32) and v7x (32/64).
    tile_n = max(128, _round_up(tile_n, 128))
    tile_n = min(tile_n, _round_up(-(-n // NUM_HALVES), 128))
    tiles_per_half = -(-n // (NUM_HALVES * tile_n))
    n_pad = NUM_HALVES * tiles_per_half * tile_n

    feats_p = feats.astype(jnp.bfloat16)
    if n_pad != n:
        feats_p = jnp.pad(feats_p, ((0, n_pad - n), (0, 0)))

    kernel = functools.partial(
        _bclassifier_kernel, qdim=qdim, tile_n=tile_n,
        tiles_per_half=tiles_per_half, n_valid=n, mask_pad=(n_pad != n))

    a_unnorm, b_part, d_part = pl.pallas_call(
        kernel,
        grid=(NUM_HALVES, tiles_per_half),
        in_specs=[
            pl.BlockSpec((tile_n, d), lambda h, i: (h * tiles_per_half + i, 0)),
            pl.BlockSpec((d, d), lambda h, i: (0, 0)),            # w_lin (resident)
            pl.BlockSpec((d, qdim + d), lambda h, i: (0, 0)),     # w_vq  (resident)
            pl.BlockSpec((cls, qdim), lambda h, i: (0, 0)),       # q_max (resident)
            pl.BlockSpec((2, qdim + d), lambda h, i: (0, 0)),     # biases
        ],
        out_specs=(
            pl.BlockSpec((cls, tile_n), lambda h, i: (0, h * tiles_per_half + i)),
            pl.BlockSpec((1, cls, d), lambda h, i: (h, 0, 0)),
            pl.BlockSpec((1, cls, 1), lambda h, i: (h, 0, 0)),
        ),
        out_shape=(
            jax.ShapeDtypeStruct((cls, n_pad), jnp.float32),          # A (unnorm)
            jax.ShapeDtypeStruct((NUM_HALVES, cls, d), jnp.float32),  # B partials
            jax.ShapeDtypeStruct((NUM_HALVES, cls, 1), jnp.float32),  # denominators
        ),
        scratch_shapes=[pltpu.VMEM((cls, d), jnp.float32),
                        pltpu.VMEM((cls, 1), jnp.float32)],
        compiler_params=pltpu.CompilerParams(
            dimension_semantics=("parallel", "arbitrary"),
            vmem_limit_bytes=32 * 1024 * 1024),
    )(feats_p, w_lin.astype(jnp.bfloat16), w_vq, q_max, bias_pack)

    # ---- tiny finalize in the wrapper: exact normalization + fcc dot ----
    denom = jnp.sum(d_part, axis=0)                  # (cls, 1), exact f32
    b_mat = jnp.sum(b_part, axis=0) / denom          # (cls, d)
    a = (a_unnorm[:, :n] / denom).T                  # (n, cls)
    c = (b_fcc + b_mat.reshape(1, -1) @ w_fcc_flat).reshape(-1)   # (cls,)
    return c, a, b_mat.reshape(1, cls, d)


def reference_forward(feats, concept, params):
    """Pure-JAX f32 reference matching the PyTorch module semantics."""
    w_lin, b_lin, w_q, b_q, w_v, b_v, w_fcc, b_fcc = params
    h = jnp.maximum(feats @ w_lin + b_lin, 0.0)
    V = h @ w_v + b_v
    Q = jnp.tanh(h @ w_q + b_q)
    q_max = jnp.tanh(concept @ w_q + b_q)
    A = jax.nn.softmax((Q @ q_max.T) / jnp.sqrt(jnp.float32(Q.shape[1])), axis=0)
    B = A.T @ V
    C = jnp.einsum('ocd,cd->o', w_fcc, B) + b_fcc
    return C, A, B.reshape(1, *B.shape)


def init_params(key, D, CLS, qdim=QDIM):
    ks = jax.random.split(key, 8)

    def lin_init(kw, kb, fan_in, fan_out):
        bound = 1.0 / np.sqrt(fan_in)
        w = jax.random.uniform(kw, (fan_in, fan_out), jnp.float32, -bound, bound)
        b = jax.random.uniform(kb, (fan_out,), jnp.float32, -bound, bound)
        return w, b

    w_lin, b_lin = lin_init(ks[0], ks[1], D, D)
    w_q, b_q = lin_init(ks[2], ks[3], D, qdim)
    w_v, b_v = lin_init(ks[4], ks[5], D, D)
    bound = 1.0 / np.sqrt(CLS * D)
    w_fcc = jax.random.uniform(ks[6], (CLS, CLS, D), jnp.float32, -bound, bound)
    b_fcc = jax.random.uniform(ks[7], (CLS,), jnp.float32, -bound, bound)
    return (w_lin, b_lin, w_q, b_q, w_v, b_v, w_fcc, b_fcc)


def _run_case(seed, N, D, CLS, tile_n):
    key = jax.random.PRNGKey(seed)
    k_feats, k_concept, k_params = jax.random.split(key, 3)
    feats = jax.random.normal(k_feats, (N, D), jnp.float32)
    concept = jax.random.normal(k_concept, (CLS, D), jnp.float32)
    params = init_params(k_params, D, CLS)

    c_out, a_out, b_out = bclassifier_forward(feats, concept, params, tile_n=tile_n)
    jax.block_until_ready((c_out, a_out, b_out))

    c_ref, a_ref, b_ref = reference_forward(feats, concept, params)
    # tolerance accounts for bf16 MXU operands (f32 accumulation / f32 finalize)
    np.testing.assert_allclose(np.asarray(c_out), np.asarray(c_ref), rtol=1e-2, atol=1e-2)
    np.testing.assert_allclose(np.asarray(a_out), np.asarray(a_ref), rtol=1e-2, atol=1e-2)
    np.testing.assert_allclose(np.asarray(b_out), np.asarray(b_ref), rtol=1e-2, atol=1e-2)

    assert c_out.shape == (CLS,)
    assert a_out.shape == (N, CLS)
    assert b_out.shape == (1, CLS, D)


if __name__ == "__main__":
    # multi-tile grid: N=512 -> grid (2 halves, 2 tiles of 128 rows each)
    _run_case(seed=0, N=512, D=32, CLS=4, tile_n=128)
    # padded / masked path: N=200 pads to 256, one 128-row tile per half
    _run_case(seed=1, N=200, D=32, CLS=5, tile_n=512)
    print("KERNEL_OK")
</pallas_src>

<mosaic_0001>
module attributes {stable_mosaic.version = 11 : i64} {
  func.func @_bclassifier_kernel(%arg0: i32, %arg1: i32, %arg2: memref<128x32xbf16, #tpu.memory_space<vmem>>, %arg3: memref<32x32xbf16, #tpu.memory_space<vmem>>, %arg4: memref<32x160xbf16, #tpu.memory_space<vmem>>, %arg5: memref<4x128xbf16, #tpu.memory_space<vmem>>, %arg6: memref<2x160xf32, #tpu.memory_space<vmem>>, %arg7: memref<4x128xf32, #tpu.memory_space<vmem>>, %arg8: memref<1x4x32xf32, #tpu.memory_space<vmem>>, %arg9: memref<1x4x1xf32, #tpu.memory_space<vmem>>, %arg10: memref<4x32xf32, #tpu.memory_space<vmem>>, %arg11: memref<4x1xf32, #tpu.memory_space<vmem>>) attributes {dimension_semantics = [#tpu.dimension_semantics<parallel>, #tpu.dimension_semantics<arbitrary>], iteration_bounds = array<i64: 2, 2>, scalar_prefetch = 0 : i64, scratch_operands = 2 : i64, tpu.core_type = #tpu.core_type<tc>, window_params = [{transform_indices = @transform_0, window_bounds = array<i64: 128, 32>}, {pipeline_mode = #tpu.pipeline_mode<synchronous>, transform_indices = @transform_1, window_bounds = array<i64: 32, 32>}, {pipeline_mode = #tpu.pipeline_mode<synchronous>, transform_indices = @transform_2, window_bounds = array<i64: 32, 160>}, {pipeline_mode = #tpu.pipeline_mode<synchronous>, transform_indices = @transform_3, window_bounds = array<i64: 4, 128>}, {pipeline_mode = #tpu.pipeline_mode<synchronous>, transform_indices = @transform_4, window_bounds = array<i64: 2, 160>}, {transform_indices = @transform_5, window_bounds = array<i64: 4, 128>}, {transform_indices = @transform_6, window_bounds = array<i64: 1, 4, 32>}, {transform_indices = @transform_7, window_bounds = array<i64: 1, 4, 1>}]} {
    %c0_i32 = arith.constant 0 : i32
    %0 = arith.cmpi eq, %arg1, %c0_i32 : i32
    %1 = arith.extui %0 : i1 to i32
    %c0_i32_0 = arith.constant 0 : i32
    %2 = arith.cmpi ne, %1, %c0_i32_0 : i32
    scf.if %2 {
      %cst_29 = arith.constant 0.000000e+00 : f32
      %43 = vector.broadcast %cst_29 : f32 to vector<4x32xf32>
      %c0_30 = arith.constant 0 : index
      %c0_31 = arith.constant 0 : index
      %44 = vector.load %arg10[%c0_30, %c0_31] : memref<4x32xf32, #tpu.memory_space<vmem>>, vector<4x32xf32>
      tpu.vector_store %arg10[%c0_30, %c0_31], %43 {strides = array<i32>} : memref<4x32xf32, #tpu.memory_space<vmem>>, vector<4x32xf32>,
      %cst_32 = arith.constant 0.000000e+00 : f32
      %45 = vector.broadcast %cst_32 : f32 to vector<4x1xf32>
      %c0_33 = arith.constant 0 : index
      %c0_34 = arith.constant 0 : index
      %46 = vector.load %arg11[%c0_33, %c0_34] : memref<4x1xf32, #tpu.memory_space<vmem>>, vector<4x1xf32>
      tpu.vector_store %arg11[%c0_33, %c0_34], %45 {strides = array<i32>} : memref<4x1xf32, #tpu.memory_space<vmem>>, vector<4x1xf32>,
    } else {
    }
    %c0 = arith.constant 0 : index
    %c0_1 = arith.constant 0 : index
    %3 = vector.load %arg6[%c0, %c0_1] : memref<2x160xf32, #tpu.memory_space<vmem>>, vector<1x160xf32>
    %c1 = arith.constant 1 : index
    %c0_2 = arith.constant 0 : index
    %4 = vector.load %arg6[%c1, %c0_2] : memref<2x160xf32, #tpu.memory_space<vmem>>, vector<1x32xf32>
    %c0_3 = arith.constant 0 : index
    %c0_4 = arith.constant 0 : index
    %5 = vector.load %arg2[%c0_3, %c0_4] : memref<128x32xbf16, #tpu.memory_space<vmem>>, vector<128x32xbf16>
    %c0_5 = arith.constant 0 : index
    %c0_6 = arith.constant 0 : index
    %6 = vector.load %arg3[%c0_5, %c0_6] : memref<32x32xbf16, #tpu.memory_space<vmem>>, vector<32x32xbf16>
    %cst = arith.constant dense<0.000000e+00> : vector<128x32xf32>
    %7 = tpu.matmul %5, %6, %cst {dimension_numbers = #tpu.dot_dimension_numbers<[1], [0], [0], [1], [0, 0, 1, 1], [], []>} : vector<128x32xbf16>, vector<32x32xbf16>, vector<128x32xf32> -> vector<128x32xf32>
    %8 = vector.broadcast %4 : vector<1x32xf32> to vector<128x32xf32>
    %9 = arith.addf %7, %8 : vector<128x32xf32>
    %cst_7 = arith.constant 0.000000e+00 : f32
    %10 = vector.broadcast %cst_7 : f32 to vector<128x32xf32>
    %11 = arith.maximumf %9, %10 : vector<128x32xf32>
    %12 = arith.truncf %11 : vector<128x32xf32> to vector<128x32xbf16>
    %c0_8 = arith.constant 0 : index
    %c0_9 = arith.constant 0 : index
    %13 = vector.load %arg4[%c0_8, %c0_9] : memref<32x160xbf16, #tpu.memory_space<vmem>>, vector<32x160xbf16>
    %cst_10 = arith.constant dense<0.000000e+00> : vector<128x160xf32>
    %14 = tpu.matmul %12, %13, %cst_10 {dimension_numbers = #tpu.dot_dimension_numbers<[1], [0], [0], [1], [0, 0, 1, 1], [], []>} : vector<128x32xbf16>, vector<32x160xbf16>, vector<128x160xf32> -> vector<128x160xf32>
    %15 = vector.broadcast %3 : vector<1x160xf32> to vector<128x160xf32>
    %16 = arith.addf %14, %15 : vector<128x160xf32>
    %17 = vector.extract_strided_slice %16 {offsets = [0, 0], sizes = [128, 128], strides = [1, 1]} : vector<128x160xf32> to vector<128x128xf32>
    %18 = math.tanh %17 : vector<128x128xf32>
    %19 = vector.extract_strided_slice %16 {offsets = [0, 128], sizes = [128, 32], strides = [1, 1]} : vector<128x160xf32> to vector<128x32xf32>
    %c0_11 = arith.constant 0 : index
    %c0_12 = arith.constant 0 : index
    %20 = vector.load %arg5[%c0_11, %c0_12] : memref<4x128xbf16, #tpu.memory_space<vmem>>, vector<4x128xbf16>
    %21 = arith.truncf %18 : vector<128x128xf32> to vector<128x128xbf16>
    %cst_13 = arith.constant dense<0.000000e+00> : vector<4x128xf32>
    %22 = tpu.matmul %20, %21, %cst_13 {dimension_numbers = #tpu.dot_dimension_numbers<[1], [1], [0], [0], [0, 0, 1, 0], [], []>} : vector<4x128xbf16>, vector<128x128xbf16>, vector<4x128xf32> -> vector<4x128xf32>
    %cst_14 = arith.constant 0.0883883461 : f32
    %23 = vector.broadcast %cst_14 : f32 to vector<4x128xf32>
    %24 = arith.mulf %22, %23 : vector<4x128xf32>
    %cst_15 = arith.constant 11.3137083 : f32
    %25 = vector.broadcast %cst_15 : f32 to vector<4x128xf32>
    %26 = arith.subf %24, %25 : vector<4x128xf32>
    %27 = math.exp %26 : vector<4x128xf32>
    %c0_16 = arith.constant 0 : index
    %c0_17 = arith.constant 0 : index
    %28 = vector.load %arg7[%c0_16, %c0_17] : memref<4x128xf32, #tpu.memory_space<vmem>>, vector<4x128xf32>
    tpu.vector_store %arg7[%c0_16, %c0_17], %27 {strides = array<i32>} : memref<4x128xf32, #tpu.memory_space<vmem>>, vector<4x128xf32>,
    %c0_18 = arith.constant 0 : index
    %c0_19 = arith.constant 0 : index
    %29 = vector.load %arg11[%c0_18, %c0_19] : memref<4x1xf32, #tpu.memory_space<vmem>>, vector<4x1xf32>
    %cst_20 = arith.constant dense<0.000000e+00> : vector<4xf32>
    %30 = vector.multi_reduction <add>, %27, %cst_20 [1] : vector<4x128xf32> to vector<4xf32>
    %31 = vector.shape_cast %30 : vector<4xf32> to vector<4x1xf32>
    %32 = arith.addf %29, %31 : vector<4x1xf32>
    %c0_21 = arith.constant 0 : index
    %c0_22 = arith.constant 0 : index
    %33 = vector.load %arg11[%c0_21, %c0_22] : memref<4x1xf32, #tpu.memory_space<vmem>>, vector<4x1xf32>
    tpu.vector_store %arg11[%c0_21, %c0_22], %32 {strides = array<i32>} : memref<4x1xf32, #tpu.memory_space<vmem>>, vector<4x1xf32>,
    %c0_23 = arith.constant 0 : index
    %c0_24 = arith.constant 0 : index
    %34 = vector.load %arg10[%c0_23, %c0_24] : memref<4x32xf32, #tpu.memory_space<vmem>>, vector<4x32xf32>
    %35 = arith.truncf %27 : vector<4x128xf32> to vector<4x128xbf16>
    %36 = arith.truncf %19 : vector<128x32xf32> to vector<128x32xbf16>
    %cst_25 = arith.constant dense<0.000000e+00> : vector<4x32xf32>
    %37 = tpu.matmul %35, %36, %cst_25 {dimension_numbers = #tpu.dot_dimension_numbers<[1], [0], [0], [1], [0, 0, 1, 1], [], []>} : vector<4x128xbf16>, vector<128x32xbf16>, vector<4x32xf32> -> vector<4x32xf32>
    %38 = arith.addf %34, %37 : vector<4x32xf32>
    %c0_26 = arith.constant 0 : index
    %c0_27 = arith.constant 0 : index
    %39 = vector.load %arg10[%c0_26, %c0_27] : memref<4x32xf32, #tpu.memory_space<vmem>>, vector<4x32xf32>
    tpu.vector_store %arg10[%c0_26, %c0_27], %38 {strides = array<i32>} : memref<4x32xf32, #tpu.memory_space<vmem>>, vector<4x32xf32>,
    %c1_i32 = arith.constant 1 : i32
    %40 = arith.cmpi eq, %arg1, %c1_i32 : i32
    %41 = arith.extui %40 : i1 to i32
    %c0_i32_28 = arith.constant 0 : i32
    %42 = arith.cmpi ne, %41, %c0_i32_28 : i32
    scf.if %42 {
      %c0_29 = arith.constant 0 : index
      %c0_30 = arith.constant 0 : index
      %43 = vector.load %arg10[%c0_29, %c0_30] : memref<4x32xf32, #tpu.memory_space<vmem>>, vector<4x32xf32>
      %44 = vector.shape_cast %43 : vector<4x32xf32> to vector<1x4x32xf32>
      %c0_31 = arith.constant 0 : index
      %c0_32 = arith.constant 0 : index
      %c0_33 = arith.constant 0 : index
      %45 = vector.load %arg8[%c0_31, %c0_32, %c0_33] : memref<1x4x32xf32, #tpu.memory_space<vmem>>, vector<1x4x32xf32>
      tpu.vector_store %arg8[%c0_31, %c0_32, %c0_33], %44 {strides = array<i32>} : memref<1x4x32xf32, #tpu.memory_space<vmem>>, vector<1x4x32xf32>,
      %c0_34 = arith.constant 0 : index
      %c0_35 = arith.constant 0 : index
      %46 = vector.load %arg11[%c0_34, %c0_35] : memref<4x1xf32, #tpu.memory_space<vmem>>, vector<4x1xf32>
      %47 = vector.shape_cast %46 : vector<4x1xf32> to vector<1x4x1xf32>
      %c0_36 = arith.constant 0 : index
      %c0_37 = arith.constant 0 : index
      %c0_38 = arith.constant 0 : index
      %48 = vector.load %arg9[%c0_36, %c0_37, %c0_38] : memref<1x4x1xf32, #tpu.memory_space<vmem>>, vector<1x4x1xf32>
      tpu.vector_store %arg9[%c0_36, %c0_37, %c0_38], %47 {strides = array<i32>} : memref<1x4x1xf32, #tpu.memory_space<vmem>>, vector<1x4x1xf32>,
    } else {
    }
    return
  }
  func.func @transform_0(%arg0: i32, %arg1: i32) -> (i32, i32) {
    %c2_i32 = arith.constant 2 : i32
    %0 = arith.muli %arg0, %c2_i32 : i32
    %1 = arith.addi %0, %arg1 : i32
    %c0_i32 = arith.constant 0 : i32
    %c0_i32_0 = arith.constant 0 : i32
    return %1, %c0_i32 : i32, i32
  }
  func.func @transform_1(%arg0: i32, %arg1: i32) -> (i32, i32) {
    %c0_i32 = arith.constant 0 : i32
    %c0_i32_0 = arith.constant 0 : i32
    %c0_i32_1 = arith.constant 0 : i32
    return %c0_i32, %c0_i32_0 : i32, i32
  }
  func.func @transform_2(%arg0: i32, %arg1: i32) -> (i32, i32) {
    %c0_i32 = arith.constant 0 : i32
    %c0_i32_0 = arith.constant 0 : i32
    %c0_i32_1 = arith.constant 0 : i32
    return %c0_i32, %c0_i32_0 : i32, i32
  }
  func.func @transform_3(%arg0: i32, %arg1: i32) -> (i32, i32) {
    %c0_i32 = arith.constant 0 : i32
    %c0_i32_0 = arith.constant 0 : i32
    %c0_i32_1 = arith.constant 0 : i32
    return %c0_i32, %c0_i32_0 : i32, i32
  }
  func.func @transform_4(%arg0: i32, %arg1: i32) -> (i32, i32) {
    %c0_i32 = arith.constant 0 : i32
    %c0_i32_0 = arith.constant 0 : i32
    %c0_i32_1 = arith.constant 0 : i32
    return %c0_i32, %c0_i32_0 : i32, i32
  }
  func.func @transform_5(%arg0: i32, %arg1: i32) -> (i32, i32) {
    %c2_i32 = arith.constant 2 : i32
    %0 = arith.muli %arg0, %c2_i32 : i32
    %1 = arith.addi %0, %arg1 : i32
    %c0_i32 = arith.constant 0 : i32
    %c0_i32_0 = arith.constant 0 : i32
    return %c0_i32, %1 : i32, i32
  }
  func.func @transform_6(%arg0: i32, %arg1: i32) -> (i32, i32, i32) {
    %c0_i32 = arith.constant 0 : i32
    %c0_i32_0 = arith.constant 0 : i32
    %c0_i32_1 = arith.constant 0 : i32
    return %arg0, %c0_i32, %c0_i32_0 : i32, i32, i32
  }
  func.func @transform_7(%arg0: i32, %arg1: i32) -> (i32, i32, i32) {
    %c0_i32 = arith.constant 0 : i32
    %c0_i32_0 = arith.constant 0 : i32
    %c0_i32_1 = arith.constant 0 : i32
    return %arg0, %c0_i32, %c0_i32_0 : i32, i32, i32
  }
}

</mosaic_0001>

<llo_original>
// kernel: tpu_custom_call.1
$region0: #{tpu_custom_call.1}
  #allocation0 [shape = 'u32[]', space=smem, size = 0x4, offset = 0x4, fixed_abs, tag = 'smem constant byte address 0x4 - core index']
  #allocation1 [shape = 'u32[144,128]{1,0:T(1,128)}', space=vmem, size = 0x12000, scoped, tag = 'internal scratch']
  #allocation2 [shape = 'f32[4,32]{1,0:T(4,128)}', space=vmem, size = 0x800, scoped, tag = 'scratch operand']
  #allocation3 [shape = 'f32[4,1]{1,0:T(4,128)}', space=vmem, size = 0x800, scoped, tag = 'scratch operand']
  %s0 = inlined_call_operand.vmem [shape: bf16[512,32], index: 0, kind: input, shape index: {}]
  %s1 = inlined_call_operand.vmem [shape: bf16[32,32], index: 1, kind: input, shape index: {}]
  %s2 = inlined_call_operand.vmem [shape: bf16[32,160], index: 2, kind: input, shape index: {}]
  %s3 = inlined_call_operand.vmem [shape: bf16[4,128], index: 3, kind: input, shape index: {}]
  %s4 = inlined_call_operand.vmem [shape: f32[2,160], index: 4, kind: input, shape index: {}]
  %s5 = inlined_call_operand.hbm [shape: f32[4,512], index: 5, kind: output, shape index: {0}]
  %s6 = inlined_call_operand.hbm [shape: f32[2,4,32], index: 6, kind: output, shape index: {1}]
  %s7 = inlined_call_operand.vmem [shape: f32[2,4,1], index: 7, kind: output, shape index: {2}]
  %8 = xla_tuple %s5, %s6, %s7
  %s9 = sld [smem:[#allocation0]]
  $region77: #{tpu_custom_call.1} parent=0
    _
  %s11 = ssub.s32 1, %s9
  %s12 = scalar_select 0, %s11, %s9
  $region1: #{tpu_custom_call.1} parent=0
    #allocation4 [shape = 'u8[4096]{0}', space=vmem, size = 0x1000, scoped, tag = 'output window, operand 0']
    #allocation5 [shape = 's32[2]{0}', space=sflag, size = 0x8, scoped, tag = 'scoped memory for tpu_custom_call.1']
    #allocation6 [shape = 'u8[4096]{0}', space=vmem, size = 0x1000, scoped, tag = 'output window, operand 1']
    #allocation7 [shape = 's32[2]{0}', space=sflag, size = 0x8, scoped, tag = 'scoped memory for tpu_custom_call.1']
    %13 = vsyncpa [#allocation5], 0
    %s14 = scalar_lea.sflag [#allocation5], 1
    %15 = vsyncpa %s14, 0
    %16 = vsyncpa [#allocation7], 0
    %s17 = scalar_lea.sflag [#allocation7], 1
    %18 = vsyncpa %s17, 0
    loop: start=0, step=1, limit=6
    $region2: #{tpu_custom_call.1} parent=1 // loop_pre_header
      _
    $region3: #{tpu_custom_call.1} parent=1 // loop_header
      %s20 = sphi 0, %s24
      %p21 = scmp.ge.s32.totalorder %s20, 6
      %s27 = sphi 0, %s39
      %s28 = sphi 0, %s35
      %s29 = sphi 0, %s27
      %s30 = sphi 0, %s28
      %s31 = sphi 0, %s29
      %s32 = sphi 0, %s30
      %s46 = sphi 0, %s48
      %s49 = sphi 0, %s46
      %s50 = sphi 0, %s49
      %s66 = sphi 0, %s50
      %s70 = sphi 0, %s70
      %s72 = sphi 0, %s70
      %s73 = sphi 0, %s72
      %s87 = sphi 0, %s73
      %s91 = sphi 0, %s91
      %s93 = sphi 0, %s91
      %s94 = sphi 0, %s93
      %s108 = sphi 0, %s94
      %s112 = sphi 0, %s112
      %s114 = sphi 0, %s112
      %s115 = sphi 0, %s114
      %s129 = sphi 0, %s115
      %s133 = sphi 0, %s133
      %s135 = sphi 0, %s133
      %s136 = sphi 0, %s135
      %s150 = sphi 0, %s136
      %s160 = sphi 0, %s162
      %s163 = sphi 0, %s160
      %s164 = sphi 0, %s163
      %s180 = sphi 0, %s164
      %s186 = sphi 0, %s188
      %s189 = sphi 0, %s186
      %s190 = sphi 0, %s189
      %s206 = sphi 0, %s190
      %s212 = sphi 0, %s214
      %s215 = sphi 0, %s212
      %s216 = sphi 0, %s215
      %s232 = sphi 0, %s216
    $region4: #{tpu_custom_call.1} parent=1 // loop_header_branch
      %23 = sbr.rel (%p21) target = $region8
    $region5: #{tpu_custom_call.1} parent=1 // loop_body
      %s25 = ssub.s32 %s20, 1
      %s26 = ssub.s32 %s20, 2
      %s33 = sadd.s32 1, %s28
      %p34 = scmp.ge.s32.totalorder %s33, 2
      %s35 = scalar_select %p34, 0, %s33
      %s36 = sadd.s32 1, %s27
      %s37 = scalar_select %p34, %s36, %s27
      %p38 = scmp.ge.s32.totalorder %s37, 2
      %s39 = scalar_select %p38, 0, %s37
      %s40 = smul.u32 %s27, 2
      %s41 = sadd.s32 %s40, %s28
      %s42 = smul.u32 %s39, 2
      %s43 = sadd.s32 %s42, %s35
      %s44 = ssub.s32 %s41, %s43
      %p45 = scmp.eq.s32.totalorder %s44, 0
      %s47 = sadd.s32 %s46, 1
      %s48 = scalar_select %p45, %s46, %s47
      %p51 = pneg %p45
      %p52 = scmp.eq.s32.totalorder %s20, 3
      %p53 = por %p51, %p52
      %p54 = scmp.ne.s32.totalorder %s46, %s49
      %p55 = scmp.eq.s32.totalorder %s20, 0
      %p56 = por %p54, %p55
      %p57 = scmp.ne.s32.totalorder %s46, %s49
      %p58 = scmp.eq.s32.totalorder %s25, 3
      %p59 = por %p57, %p58
      %p60 = scmp.ne.s32.totalorder %s49, %s50
      %p61 = scmp.eq.s32.totalorder %s25, 0
      %p62 = por %p60, %p61
      %p63 = scmp.ne.s32.totalorder %s49, %s50
      %p64 = scmp.eq.s32.totalorder %s26, 3
      %p65 = por %p63, %p64
      %p67 = scmp.ne.s32.totalorder %s50, %s66
      %p68 = scmp.eq.s32.totalorder %s26, 0
      %p69 = por %p67, %p68
      %s71 = sadd.s32 %s70, 1
      %p74 = scmp.eq.s32.totalorder %s20, 3
      %p75 = scmp.ne.s32.totalorder %s70, %s72
      %p76 = scmp.eq.s32.totalorder %s20, 0
      %p77 = por %p75, %p76
      %p78 = scmp.ne.s32.totalorder %s70, %s72
      %p79 = scmp.eq.s32.totalorder %s25, 3
      %p80 = por %p78, %p79
      %p81 = scmp.ne.s32.totalorder %s72, %s73
      %p82 = scmp.eq.s32.totalorder %s25, 0
      %p83 = por %p81, %p82
      %p84 = scmp.ne.s32.totalorder %s72, %s73
      %p85 = scmp.eq.s32.totalorder %s26, 3
      %p86 = por %p84, %p85
      %p88 = scmp.ne.s32.totalorder %s73, %s87
      %p89 = scmp.eq.s32.totalorder %s26, 0
      %p90 = por %p88, %p89
      %s92 = sadd.s32 %s91, 1
      %p95 = scmp.eq.s32.totalorder %s20, 3
      %p96 = scmp.ne.s32.totalorder %s91, %s93
      %p97 = scmp.eq.s32.totalorder %s20, 0
      %p98 = por %p96, %p97
      %p99 = scmp.ne.s32.totalorder %s91, %s93
      %p100 = scmp.eq.s32.totalorder %s25, 3
      %p101 = por %p99, %p100
      %p102 = scmp.ne.s32.totalorder %s93, %s94
      %p103 = scmp.eq.s32.totalorder %s25, 0
      %p104 = por %p102, %p103
      %p105 = scmp.ne.s32.totalorder %s93, %s94
      %p106 = scmp.eq.s32.totalorder %s26, 3
      %p107 = por %p105, %p106
      %p109 = scmp.ne.s32.totalorder %s94, %s108
      %p110 = scmp.eq.s32.totalorder %s26, 0
      %p111 = por %p109, %p110
      %s113 = sadd.s32 %s112, 1
      %p116 = scmp.eq.s32.totalorder %s20, 3
      %p117 = scmp.ne.s32.totalorder %s112, %s114
      %p118 = scmp.eq.s32.totalorder %s20, 0
      %p119 = por %p117, %p118
      %p120 = scmp.ne.s32.totalorder %s112, %s114
      %p121 = scmp.eq.s32.totalorder %s25, 3
      %p122 = por %p120, %p121
      %p123 = scmp.ne.s32.totalorder %s114, %s115
      %p124 = scmp.eq.s32.totalorder %s25, 0
      %p125 = por %p123, %p124
      %p126 = scmp.ne.s32.totalorder %s114, %s115
      %p127 = scmp.eq.s32.totalorder %s26, 3
      %p128 = por %p126, %p127
      %p130 = scmp.ne.s32.totalorder %s115, %s129
      %p131 = scmp.eq.s32.totalorder %s26, 0
      %p132 = por %p130, %p131
      %s134 = sadd.s32 %s133, 1
      %p137 = scmp.eq.s32.totalorder %s20, 3
      %p138 = scmp.ne.s32.totalorder %s133, %s135
      %p139 = scmp.eq.s32.totalorder %s20, 0
      %p140 = por %p138, %p139
      %p141 = scmp.ne.s32.totalorder %s133, %s135
      %p142 = scmp.eq.s32.totalorder %s25, 3
      %p143 = por %p141, %p142
      %p144 = scmp.ne.s32.totalorder %s135, %s136
      %p145 = scmp.eq.s32.totalorder %s25, 0
      %p146 = por %p144, %p145
      %p147 = scmp.ne.s32.totalorder %s135, %s136
      %p148 = scmp.eq.s32.totalorder %s26, 3
      %p149 = por %p147, %p148
      %p151 = scmp.ne.s32.totalorder %s136, %s150
      %p152 = scmp.eq.s32.totalorder %s26, 0
      %p153 = por %p151, %p152
      %s154 = smul.u32 %s27, 2
      %s155 = sadd.s32 %s154, %s28
      %s156 = smul.u32 %s39, 2
      %s157 = sadd.s32 %s156, %s35
      %s158 = ssub.s32 %s155, %s157
      %p159 = scmp.eq.s32.totalorder %s158, 0
      %s161 = sadd.s32 %s160, 1
      %s162 = scalar_select %p159, %s160, %s161
      %p165 = pneg %p159
      %p166 = scmp.eq.s32.totalorder %s20, 3
      %p167 = por %p165, %p166
      %p168 = scmp.ne.s32.totalorder %s160, %s163
      %p169 = scmp.eq.s32.totalorder %s20, 0
      %p170 = por %p168, %p169
      %p171 = scmp.ne.s32.totalorder %s160, %s163
      %p172 = scmp.eq.s32.totalorder %s25, 3
      %p173 = por %p171, %p172
      %p174 = scmp.ne.s32.totalorder %s163, %s164
      %p175 = scmp.eq.s32.totalorder %s25, 0
      %p176 = por %p174, %p175
      %p177 = scmp.ne.s32.totalorder %s163, %s164
      %p178 = scmp.eq.s32.totalorder %s26, 3
      %p179 = por %p177, %p178
      %p181 = scmp.ne.s32.totalorder %s164, %s180
      %p182 = scmp.eq.s32.totalorder %s26, 0
      %p183 = por %p181, %p182
      %s184 = ssub.s32 %s27, %s39
      %p185 = scmp.eq.s32.totalorder %s184, 0
      %s187 = sadd.s32 %s186, 1
      %s188 = scalar_select %p185, %s186, %s187
      %p191 = pneg %p185
      %p192 = scmp.eq.s32.totalorder %s20, 3
      %p193 = por %p191, %p192
      %p194 = scmp.ne.s32.totalorder %s186, %s189
      %p195 = scmp.eq.s32.totalorder %s20, 0
      %p196 = por %p194, %p195
      %p197 = scmp.ne.s32.totalorder %s186, %s189
      %p198 = scmp.eq.s32.totalorder %s25, 3
      %p199 = por %p197, %p198
      %p200 = scmp.ne.s32.totalorder %s189, %s190
      %p201 = scmp.eq.s32.totalorder %s25, 0
      %p202 = por %p200, %p201
      %p203 = scmp.ne.s32.totalorder %s189, %s190
      %p204 = scmp.eq.s32.totalorder %s26, 3
      %p205 = por %p203, %p204
      %p207 = scmp.ne.s32.totalorder %s190, %s206
      %p208 = scmp.eq.s32.totalorder %s26, 0
      %p209 = por %p207, %p208
      %s210 = ssub.s32 %s27, %s39
      %p211 = scmp.eq.s32.totalorder %s210, 0
      %s213 = sadd.s32 %s212, 1
      %s214 = scalar_select %p211, %s212, %s213
      %p217 = pneg %p211
      %p218 = scmp.eq.s32.totalorder %s20, 3
      %p219 = por %p217, %p218
      %p220 = scmp.ne.s32.totalorder %s212, %s215
      %p221 = scmp.eq.s32.totalorder %s20, 0
      %p222 = por %p220, %p221
      %p223 = scmp.ne.s32.totalorder %s212, %s215
      %p224 = scmp.eq.s32.totalorder %s25, 3
      %p225 = por %p223, %p224
      %p226 = scmp.ne.s32.totalorder %s215, %s216
      %p227 = scmp.eq.s32.totalorder %s25, 0
      %p228 = por %p226, %p227
      %p229 = scmp.ne.s32.totalorder %s215, %s216
      %p230 = scmp.eq.s32.totalorder %s26, 3
      %p231 = por %p229, %p230
      %p233 = scmp.ne.s32.totalorder %s216, %s232
      %p234 = scmp.eq.s32.totalorder %s26, 0
      %p235 = por %p233, %p234
      %p236 = scmp.le.s32.totalorder 1, %s20
      %p237 = scmp.lt.s32.totalorder %s20, 5
      %p238 = pnand %p236, %p237
      %p239 = pneg %p238
      // Predicated region
      $region9: #{tpu_custom_call.1} parent=5 // pred_check
        _
      $region10: #{tpu_custom_call.1} parent=5 // pred_check_branch
        %241 = sbr.rel (%p238) target = $region12
      $region11: #{tpu_custom_call.1} parent=5 // pred_region
        %s242 = ssub.s32 %s20, 1
        // Predicated region
        $region13: #{tpu_custom_call.1} parent=11 // pred_check
          %p243 = pneg %p83
        $region14: #{tpu_custom_call.1} parent=11 // pred_check_branch
          %245 = sbr.rel (%p243) target = $region16
        $region15: #{tpu_custom_call.1} parent=11 // pred_region
          _
        $region16: #{tpu_custom_call.1} parent=11 // pred_fallthru
          _
        // Predicated region
        $region17: #{tpu_custom_call.1} parent=11 // pred_check
          %p246 = pneg %p104
        $region18: #{tpu_custom_call.1} parent=11 // pred_check_branch
          %248 = sbr.rel (%p246) target = $region20
        $region19: #{tpu_custom_call.1} parent=11 // pred_region
          _
        $region20: #{tpu_custom_call.1} parent=11 // pred_fallthru
          _
        // Predicated region
        $region21: #{tpu_custom_call.1} parent=11 // pred_check
          %p249 = pneg %p125
        $region22: #{tpu_custom_call.1} parent=11 // pred_check_branch
          %251 = sbr.rel (%p249) target = $region24
        $region23: #{tpu_custom_call.1} parent=11 // pred_region
          _
        $region24: #{tpu_custom_call.1} parent=11 // pred_fallthru
          _
        // Predicated region
        $region25: #{tpu_custom_call.1} parent=11 // pred_check
          %p252 = pneg %p146
        $region26: #{tpu_custom_call.1} parent=11 // pred_check_branch
          %254 = sbr.rel (%p252) target = $region28
        $region27: #{tpu_custom_call.1} parent=11 // pred_region
          _
        $region28: #{tpu_custom_call.1} parent=11 // pred_fallthru
          _
      $region12: #{tpu_custom_call.1} parent=5 // pred_fallthru
        _
      %p255 = scmp.lt.s32.totalorder %s20, 4
      // Predicated region
      $region29: #{tpu_custom_call.1} parent=5 // pred_check
        %p256 = pneg %p255
      $region30: #{tpu_custom_call.1} parent=5 // pred_check_branch
        %258 = sbr.rel (%p256) target = $region32
      $region31: #{tpu_custom_call.1} parent=5 // pred_region
        // Predicated region
        $region33: #{tpu_custom_call.1} parent=31 // pred_check
          %p259 = pneg %p56
        $region34: #{tpu_custom_call.1} parent=31 // pred_check_branch
          %261 = sbr.rel (%p259) target = $region36
        $region35: #{tpu_custom_call.1} parent=31 // pred_region
          %s262 = smul.u32 %s27, 2
          %s263 = sadd.s32 %s262, %s28
          %s264 = smul.u32 16, %s263
          %p265 = scmp.lt.s32.totalorder %s264, 63
          %s266 = scalar_select %p265, %s264, 63
          %s267 = smul.addr %s266, 4
          %s268 = scalar_lea.vmem %s0, %s267
          %s269 = smul.u32 %s27, 2
          %s270 = sadd.s32 %s269, %s28
          %s271 = smul.u32 16, %s270
        $region36: #{tpu_custom_call.1} parent=31 // pred_fallthru
          _
      $region32: #{tpu_custom_call.1} parent=5 // pred_fallthru
        _
      %p272 = scmp.le.s32.totalorder 1, %s20
      %p273 = scmp.lt.s32.totalorder %s20, 5
      %p274 = pnand %p272, %p273
      %p275 = pneg %p274
      // Predicated region
      $region37: #{tpu_custom_call.1} parent=5 // pred_check
        _
      $region38: #{tpu_custom_call.1} parent=5 // pred_check_branch
        %277 = sbr.rel (%p274) target = $region40
      $region39: #{tpu_custom_call.1} parent=5 // pred_region
        %s278 = ssub.s32 %s20, 1
        %s279 = smul.u32 %s29, 2
        %s280 = sadd.s32 %s279, %s30
        %s281 = smul.u32 16, %s280
        %p282 = scmp.lt.s32.totalorder %s281, 63
        %s283 = scalar_select %p282, %s281, 63
        %s284 = smul.addr %s283, 4
        %s285 = scalar_lea.vmem %s0, %s284
        %p286 = pneg %p62
        %p287 = pneg %p59
        %p288 = pneg %p83
        %p289 = pneg %p80
        %p290 = pneg %p104
        %p291 = pneg %p101
        %p292 = pneg %p125
        %p293 = pneg %p122
        %p294 = pneg %p146
        %p295 = pneg %p143
        %p296 = pneg %p176
        %p297 = pneg %p173
        %s298 = sand.u32 %s163, 1
        %s299 = scalar_lea.sflag [#allocation5], %s298
        %s300 = sand.u32 %s163, 1
        %s301 = smul.addr %s300, 4
        %s302 = scalar_lea.vmem [#allocation4], %s301
        %p303 = pneg %p202
        %p304 = pneg %p199
        %s305 = sand.u32 %s189, 1
        %s306 = scalar_lea.sflag [#allocation7], %s305
        %s307 = sand.u32 %s189, 1
        %s308 = smul.addr %s307, 4
        %s309 = scalar_lea.vmem [#allocation6], %s308
        %p310 = pneg %p228
        %p311 = pneg %p225
        %p312 = scmp.lt.s32.totalorder %s29, 1
        %s313 = scalar_select %p312, %s29, 1
        %s314 = smul.addr %s313, 4
        %s315 = scalar_lea.vmem %s7, %s314
        %s316 = smul.u32 %s29, 2
        %s317 = sadd.s32 %s316, %s30
        %s318 = smul.u32 16, %s317
        %p319 = scmp.lt.s32.totalorder %s318, 63
        %s320 = scalar_select %p319, %s318, 63
        %s321 = smul.addr %s320, 4
        %s322 = scalar_lea.vmem %s0, %s321
        %s323 = smul.u32 %s29, 2
        %s324 = sadd.s32 %s323, %s30
        %s325 = smul.u32 16, %s324
        %s326 = smul.u32 %s29, 2
        %s327 = sadd.s32 %s326, %s30
        %p328 = scmp.lt.s32.totalorder %s29, 1
        %s329 = scalar_select %p328, %s29, 1
        %s330 = smul.addr %s329, 4
        %s331 = scalar_lea.vmem %s7, %s330
        %p333 = scmp.eq.s32.totalorder %s30, 0
        // Predicated region
        $region41: #{tpu_custom_call.1} parent=39 // pred_check
          %p334 = pneg %p333
        $region42: #{tpu_custom_call.1} parent=39 // pred_check_branch
          %336 = sbr.rel (%p334) target = $region44
        $region43: #{tpu_custom_call.1} parent=39 // pred_region
          %vm337 = vcmask 257024
          %338 = vst.msk [vmem:[#allocation2] sm:$0xf] %vm337, 0.0
          %vm339 = vcmask 3072
          %340 = vst.msk [vmem:[#allocation3] sm:$0xf] %vm339, 0.0
        $region44: #{tpu_custom_call.1} parent=39 // pred_fallthru
          _
        %v341 = vld [vmem:[%s4] ss:$2 sm:$0x3]
        %v342 = vld [vmem:[%s4 + $0x1] sm:$0x1]
        %v343 = vld [vmem:[%s322] sm:$0xf]
        %v344 = vld [vmem:[%s322 + $0x4] sm:$0xf]
        %v345 = vld [vmem:[%s322 + $0x8] sm:$0xf]
        %v346 = vld [vmem:[%s322 + $0xc] sm:$0xf]
        %v347 = vld [vmem:[%s322 + $0x10] sm:$0xf]
        %v348 = vld [vmem:[%s322 + $0x14] sm:$0xf]
        %v349 = vld [vmem:[%s322 + $0x18] sm:$0xf]
        %v350 = vld [vmem:[%s322 + $0x1c] sm:$0xf]
        %v351 = vld [vmem:[%s322 + $0x20] sm:$0xf]
        %v352 = vld [vmem:[%s322 + $0x24] sm:$0xf]
        %v353 = vld [vmem:[%s322 + $0x28] sm:$0xf]
        %v354 = vld [vmem:[%s322 + $0x2c] sm:$0xf]
        %v355 = vld [vmem:[%s322 + $0x30] sm:$0xf]
        %v356 = vld [vmem:[%s322 + $0x34] sm:$0xf]
        %v357 = vld [vmem:[%s322 + $0x38] sm:$0xf]
        %v358 = vld [vmem:[%s322 + $0x3c] sm:$0xf]
        %v359 = vld [vmem:[%s1] sm:$0xf]
        %v360 = vld [vmem:[%s1 + $0x4] sm:$0xf]
        %v361 = vld [vmem:[%s1 + $0x8] sm:$0xf]
        %v362 = vld [vmem:[%s1 + $0xc] sm:$0xf]
        %v363 = vlaneseq
        %v364 = vshrl.u32 %v363, 7
        %v365 = vsub.s32 0, %v364
        %v366 = vrot.slane %v342, %v365
        %v383 = vunpack.c.l.b16 %v343
        %v384 = vunpack.c.l.b16 %v344
        %v385 = vunpack.c.l.b16 %v345
        %v386 = vunpack.c.l.b16 %v346
        %v387 = vunpack.c.l.b16 %v347
        %v388 = vunpack.c.l.b16 %v348
        %v389 = vunpack.c.l.b16 %v349
        %v390 = vunpack.c.l.b16 %v350
        %v391 = vunpack.c.l.b16 %v351
        %v392 = vunpack.c.l.b16 %v352
        %v393 = vunpack.c.l.b16 %v353
        %v394 = vunpack.c.l.b16 %v354
        %v395 = vunpack.c.l.b16 %v355
        %v396 = vunpack.c.l.b16 %v356
        %v397 = vunpack.c.l.b16 %v357
        %v398 = vunpack.c.l.b16 %v358
        %v399 = vpack.c.b16 %v384, %v383
        %v400 = vpack.c.b16 %v386, %v385
        %v401 = vpack.c.b16 %v388, %v387
        %v402 = vpack.c.b16 %v390, %v389
        %v403 = vpack.c.b16 %v392, %v391
        %v404 = vpack.c.b16 %v394, %v393
        %v405 = vpack.c.b16 %v396, %v395
        %v406 = vpack.c.b16 %v398, %v397
        %v411 = vunpack.c.l.b16 %v359
        %v412 = vunpack.c.l.b16 %v360
        %v413 = vunpack.c.l.b16 %v361
        %v414 = vunpack.c.l.b16 %v362
        %v415 = vpack.c.b16 %v412, %v411
        %v416 = vpack.c.b16 %v414, %v413
        %vm419 = vcmask 261120
        %v421 = vsel %vm419, %v399, 0
        %v424 = vsel %vm419, %v400, 0
        %v427 = vsel %vm419, %v401, 0
        %v430 = vsel %vm419, %v402, 0
        %v433 = vsel %vm419, %v403, 0
        %v436 = vsel %vm419, %v404, 0
        %v439 = vsel %vm419, %v405, 0
        %v442 = vsel %vm419, %v406, 0
        %444 = vmatprep.subr.bf16.mxu0 0
        %445 = vmatpush1.bf16.msra.mxu0 %v415
        %446 = vmatprep.subr.bf16.mxu0 0
        %447 = vmatpush1.bf16.msra.mxu0 %v416
        %448 = vmatprep.subr.bf16.mxu0 0
        %449 = vmatpush1.bf16.msra.mxu0 0
        %450 = vmatprep.subr.bf16.mxu0 0
        %451 = vmatpush1.bf16.msra.mxu0 0
        %452 = vmatprep.subr.bf16.mxu0 0
        %453 = vmatpush1.bf16.msra.mxu0 0
        %454 = vmatprep.subr.bf16.mxu0 0
        %455 = vmatpush1.bf16.msra.mxu0 0
        %456 = vmatprep.subr.bf16.mxu0 0
        %457 = vmatpush1.bf16.msra.mxu0 0
        %458 = vmatprep.subr.bf16.mxu0 0
        %459 = vmatpush1.bf16.msra.mxu0 0
        %460 = vmatprep.subr.bf16.mxu0 0
        %461 = vmatpush1.bf16.msra.mxu0 0
        %462 = vmatprep.subr.bf16.mxu0 0
        %463 = vmatpush1.bf16.msra.mxu0 0
        %464 = vmatprep.subr.bf16.mxu0 0
        %465 = vmatpush1.bf16.msra.mxu0 0
        %466 = vmatprep.subr.bf16.mxu0 0
        %467 = vmatpush1.bf16.msra.mxu0 0
        %468 = vmatprep.subr.bf16.mxu0 0
        %469 = vmatpush1.bf16.msra.mxu0 0
        %470 = vmatprep.subr.bf16.mxu0 0
        %471 = vmatpush1.bf16.msra.mxu0 0
        %472 = vmatprep.subr.bf16.mxu0 0
        %473 = vmatpush1.bf16.msra.mxu0 0
        %474 = vmatprep.subr.bf16.mxu0 0
        %475 = vmatpush1.bf16.msra.mxu0 0
        %476 = vmatprep.mubr.bf16.mxu0 0
        %477 = vmatmul.mubr.bf16.gmra.mrb[0].mxu0 %v421
        %v478 = vpop.f32.mrb[0].mxu0
        %v479 = vadd.f32 %v366, %v478
        %v480 = vpop.f32.mrb[0].mxu0
        %v481 = vpop.f32.mrb[0].mxu0
        %v482 = vadd.f32 %v366, %v481
        %v483 = vpop.f32.mrb[0].mxu0
        %484 = vmatprep.mubr.bf16.mxu0 0
        %485 = vmatmul.mubr.bf16.gmra.mrb[0].mxu0 %v424
        %v486 = vpop.f32.mrb[0].mxu0
        %v487 = vadd.f32 %v366, %v486
        %v488 = vpop.f32.mrb[0].mxu0
        %v489 = vpop.f32.mrb[0].mxu0
        %v490 = vadd.f32 %v366, %v489
        %v491 = vpop.f32.mrb[0].mxu0
        %492 = vmatprep.mubr.bf16.mxu0 0
        %493 = vmatmul.mubr.bf16.gmra.mrb[0].mxu0 %v427
        %v494 = vpop.f32.mrb[0].mxu0
        %v495 = vadd.f32 %v366, %v494
        %v496 = vpop.f32.mrb[0].mxu0
        %v497 = vpop.f32.mrb[0].mxu0
        %v498 = vadd.f32 %v366, %v497
        %v499 = vpop.f32.mrb[0].mxu0
        %500 = vmatprep.mubr.bf16.mxu0 0
        %501 = vmatmul.mubr.bf16.gmra.mrb[0].mxu0 %v430
        %v502 = vpop.f32.mrb[0].mxu0
        %v503 = vadd.f32 %v366, %v502
        %v504 = vpop.f32.mrb[0].mxu0
        %v505 = vpop.f32.mrb[0].mxu0
        %v506 = vadd.f32 %v366, %v505
        %v507 = vpop.f32.mrb[0].mxu0
        %508 = vmatprep.mubr.bf16.mxu0 0
        %509 = vmatmul.mubr.bf16.gmra.mrb[0].mxu0 %v433
        %v510 = vpop.f32.mrb[0].mxu0
        %v511 = vadd.f32 %v366, %v510
        %v512 = vpop.f32.mrb[0].mxu0
        %v513 = vpop.f32.mrb[0].mxu0
        %v514 = vadd.f32 %v366, %v513
        %v515 = vpop.f32.mrb[0].mxu0
        %516 = vmatprep.mubr.bf16.mxu0 0
        %517 = vmatmul.mubr.bf16.gmra.mrb[0].mxu0 %v436
        %v518 = vpop.f32.mrb[0].mxu0
        %v519 = vadd.f32 %v366, %v518
        %v520 = vpop.f32.mrb[0].mxu0
        %v521 = vpop.f32.mrb[0].mxu0
        %v522 = vadd.f32 %v366, %v521
        %v523 = vpop.f32.mrb[0].mxu0
        %524 = vmatprep.mubr.bf16.mxu0 0
        %525 = vmatmul.mubr.bf16.gmra.mrb[0].mxu0 %v439
        %v526 = vpop.f32.mrb[0].mxu0
        %v527 = vadd.f32 %v366, %v526
        %v528 = vpop.f32.mrb[0].mxu0
        %v529 = vpop.f32.mrb[0].mxu0
        %v530 = vadd.f32 %v366, %v529
        %v531 = vpop.f32.mrb[0].mxu0
        %532 = vmatprep.mubr.bf16.mxu0 0
        %533 = vmatmul.mubr.bf16.gmra.mrb[0].mxu0 %v442
        %v534 = vpop.f32.mrb[0].mxu0
        %v535 = vadd.f32 %v366, %v534
        %v536 = vpop.f32.mrb[0].mxu0
        %v537 = vpop.f32.mrb[0].mxu0
        %v538 = vadd.f32 %v366, %v537
        %v539 = vpop.f32.mrb[0].mxu0
        %540 = vdwg.mxu0
        %v541 = vmax.f32 %v479, 0.0
        %v542 = vmax.f32 %v482, 0.0
        %v543 = vmax.f32 %v487, 0.0
        %v544 = vmax.f32 %v490, 0.0
        %v545 = vmax.f32 %v495, 0.0
        %v546 = vmax.f32 %v498, 0.0
        %v547 = vmax.f32 %v503, 0.0
        %v548 = vmax.f32 %v506, 0.0
        %v549 = vmax.f32 %v511, 0.0
        %v550 = vmax.f32 %v514, 0.0
        %v551 = vmax.f32 %v519, 0.0
        %v552 = vmax.f32 %v522, 0.0
        %v553 = vmax.f32 %v527, 0.0
        %v554 = vmax.f32 %v530, 0.0
        %v555 = vmax.f32 %v535, 0.0
        %v556 = vmax.f32 %v538, 0.0
        %v557 = vpack.c.bf16 %v542, %v541
        %v558 = vpack.c.bf16 %v544, %v543
        %v559 = vpack.c.bf16 %v546, %v545
        %v560 = vpack.c.bf16 %v548, %v547
        %v561 = vpack.c.bf16 %v550, %v549
        %v562 = vpack.c.bf16 %v552, %v551
        %v563 = vpack.c.bf16 %v554, %v553
        %v564 = vpack.c.bf16 %v556, %v555
        %v565 = vld [vmem:[%s2] sm:$0xff]
        %v566 = vld [vmem:[%s2 + $0x8] sm:$0xff]
        %v567 = vld [vmem:[%s2 + $0x10] sm:$0xff]
        %v568 = vld [vmem:[%s2 + $0x18] sm:$0xff]
        %v570 = vlaneseq
        %v571 = vshrl.u32 %v570, 7
        %v572 = vsub.s32 0, %v571
        %v573 = vrot.slane %v341, %v572
        %v574 = vlaneseq
        %v575 = vshrl.u32 %v574, 7
        %v576 = vsub.s32 1, %v575
        %v577 = vrot.slane %v341, %v576
        %v584 = vunpack.c.l.b16 %v565
        %v585 = vunpack.c.h.b16 %v565
        %v586 = vunpack.c.l.b16 %v566
        %v587 = vunpack.c.h.b16 %v566
        %v588 = vunpack.c.l.b16 %v567
        %v589 = vunpack.c.h.b16 %v567
        %v590 = vunpack.c.l.b16 %v568
        %v591 = vunpack.c.h.b16 %v568
        %v592 = vpack.c.b16 %v586, %v584
        %v593 = vpack.c.b16 %v587, %v585
        %v594 = vpack.c.b16 %v590, %v588
        %v595 = vpack.c.b16 %v591, %v589
        %v601 = vsel %vm419, %v557, 0
        %v604 = vsel %vm419, %v558, 0
        %v607 = vsel %vm419, %v559, 0
        %v610 = vsel %vm419, %v560, 0
        %v613 = vsel %vm419, %v561, 0
        %v616 = vsel %vm419, %v562, 0
        %v619 = vsel %vm419, %v563, 0
        %v622 = vsel %vm419, %v564, 0
        %624 = vmatprep.subr.bf16.mxu0 %v593
        %625 = vmatpush1.bf16.msra.mxu0 %v592
        %626 = vmatprep.subr.bf16.mxu0 %v595
        %627 = vmatpush1.bf16.msra.mxu0 %v594
        %628 = vmatprep.subr.bf16.mxu0 0
        %629 = vmatpush1.bf16.msra.mxu0 0
        %630 = vmatprep.subr.bf16.mxu0 0
        %631 = vmatpush1.bf16.msra.mxu0 0
        %632 = vmatprep.subr.bf16.mxu0 0
        %633 = vmatpush1.bf16.msra.mxu0 0
        %634 = vmatprep.subr.bf16.mxu0 0
        %635 = vmatpush1.bf16.msra.mxu0 0
        %636 = vmatprep.subr.bf16.mxu0 0
        %637 = vmatpush1.bf16.msra.mxu0 0
        %638 = vmatprep.subr.bf16.mxu0 0
        %639 = vmatpush1.bf16.msra.mxu0 0
        %640 = vmatprep.subr.bf16.mxu0 0
        %641 = vmatpush1.bf16.msra.mxu0 0
        %642 = vmatprep.subr.bf16.mxu0 0
        %643 = vmatpush1.bf16.msra.mxu0 0
        %644 = vmatprep.subr.bf16.mxu0 0
        %645 = vmatpush1.bf16.msra.mxu0 0
        %646 = vmatprep.subr.bf16.mxu0 0
        %647 = vmatpush1.bf16.msra.mxu0 0
        %648 = vmatprep.subr.bf16.mxu0 0
        %649 = vmatpush1.bf16.msra.mxu0 0
        %650 = vmatprep.subr.bf16.mxu0 0
        %651 = vmatpush1.bf16.msra.mxu0 0
        %652 = vmatprep.subr.bf16.mxu0 0
        %653 = vmatpush1.bf16.msra.mxu0 0
        %654 = vmatprep.subr.bf16.mxu0 0
        %655 = vmatpush1.bf16.msra.mxu0 0
        %656 = vmatprep.mubr.bf16.mxu0 0
        %657 = vmatmul.mubr.bf16.gmra.mrb[0].mxu0 %v601
        %v658 = vpop.f32.mrb[0].mxu0
        %v659 = vadd.f32 %v573, %v658
        %v660 = vpop.f32.mrb[0].mxu0
        %v661 = vadd.f32 %v577, %v660
        %v662 = vpop.f32.mrb[0].mxu0
        %v663 = vadd.f32 %v573, %v662
        %v664 = vpop.f32.mrb[0].mxu0
        %v665 = vadd.f32 %v577, %v664
        %666 = vmatprep.mubr.bf16.mxu0 0
        %667 = vmatmul.mubr.bf16.gmra.mrb[0].mxu0 %v604
        %v668 = vpop.f32.mrb[0].mxu0
        %v669 = vadd.f32 %v573, %v668
        %v670 = vpop.f32.mrb[0].mxu0
        %v671 = vadd.f32 %v577, %v670
        %v672 = vpop.f32.mrb[0].mxu0
        %v673 = vadd.f32 %v573, %v672
        %v674 = vpop.f32.mrb[0].mxu0
        %v675 = vadd.f32 %v577, %v674
        %676 = vmatprep.mubr.bf16.mxu0 0
        %677 = vmatmul.mubr.bf16.gmra.mrb[0].mxu0 %v607
        %v678 = vpop.f32.mrb[0].mxu0
        %v679 = vadd.f32 %v573, %v678
        %v680 = vpop.f32.mrb[0].mxu0
        %v681 = vadd.f32 %v577, %v680
        %v682 = vpop.f32.mrb[0].mxu0
        %v683 = vadd.f32 %v573, %v682
        %v684 = vpop.f32.mrb[0].mxu0
        %v685 = vadd.f32 %v577, %v684
        %686 = vmatprep.mubr.bf16.mxu0 0
        %687 = vmatmul.mubr.bf16.gmra.mrb[0].mxu0 %v610
        %v688 = vpop.f32.mrb[0].mxu0
        %v689 = vadd.f32 %v573, %v688
        %v690 = vpop.f32.mrb[0].mxu0
        %v691 = vadd.f32 %v577, %v690
        %v692 = vpop.f32.mrb[0].mxu0
        %v693 = vadd.f32 %v573, %v692
        %v694 = vpop.f32.mrb[0].mxu0
        %v695 = vadd.f32 %v577, %v694
        %696 = vmatprep.mubr.bf16.mxu0 0
        %697 = vmatmul.mubr.bf16.gmra.mrb[0].mxu0 %v613
        %v698 = vpop.f32.mrb[0].mxu0
        %v699 = vadd.f32 %v573, %v698
        %v700 = vpop.f32.mrb[0].mxu0
        %v701 = vadd.f32 %v577, %v700
        %v702 = vpop.f32.mrb[0].mxu0
        %v703 = vadd.f32 %v573, %v702
        %v704 = vpop.f32.mrb[0].mxu0
        %v705 = vadd.f32 %v577, %v704
        %706 = vmatprep.mubr.bf16.mxu0 0
        %707 = vmatmul.mubr.bf16.gmra.mrb[0].mxu0 %v616
        %v708 = vpop.f32.mrb[0].mxu0
        %v709 = vadd.f32 %v573, %v708
        %v710 = vpop.f32.mrb[0].mxu0
        %v711 = vadd.f32 %v577, %v710
        %v712 = vpop.f32.mrb[0].mxu0
        %v713 = vadd.f32 %v573, %v712
        %v714 = vpop.f32.mrb[0].mxu0
        %v715 = vadd.f32 %v577, %v714
        %716 = vmatprep.mubr.bf16.mxu0 0
        %717 = vmatmul.mubr.bf16.gmra.mrb[0].mxu0 %v619
        %v718 = vpop.f32.mrb[0].mxu0
        %v719 = vadd.f32 %v573, %v718
        %v720 = vpop.f32.mrb[0].mxu0
        %v721 = vadd.f32 %v577, %v720
        %v722 = vpop.f32.mrb[0].mxu0
        %v723 = vadd.f32 %v573, %v722
        %v724 = vpop.f32.mrb[0].mxu0
        %v725 = vadd.f32 %v577, %v724
        %726 = vmatprep.mubr.bf16.mxu0 0
        %727 = vmatmul.mubr.bf16.gmra.mrb[0].mxu0 %v622
        %v728 = vpop.f32.mrb[0].mxu0
        %v729 = vadd.f32 %v573, %v728
        %v730 = vpop.f32.mrb[0].mxu0
        %v731 = vadd.f32 %v577, %v730
        %v732 = vpop.f32.mrb[0].mxu0
        %v733 = vadd.f32 %v573, %v732
        %v734 = vpop.f32.mrb[0].mxu0
        %v735 = vadd.f32 %v577, %v734
        %736 = vdwg.mxu0
        %v737 = vtanh.pop %v659
        %v738 = vtanh.pop %v663
        %v739 = vtanh.pop %v669
        %v740 = vtanh.pop %v673
        %v741 = vtanh.pop %v679
        %v742 = vtanh.pop %v683
        %v743 = vtanh.pop %v689
        %v744 = vtanh.pop %v693
        %v745 = vtanh.pop %v699
        %v746 = vtanh.pop %v703
        %v747 = vtanh.pop %v709
        %v748 = vtanh.pop %v713
        %v749 = vtanh.pop %v719
        %v750 = vtanh.pop %v723
        %v751 = vtanh.pop %v729
        %v752 = vtanh.pop %v733
        %v753 = vld [vmem:[%s3] sm:$0x3]
        %v754 = vpack.c.bf16 %v738, %v737
        %v755 = vpack.c.bf16 %v740, %v739
        %v756 = vpack.c.bf16 %v742, %v741
        %v757 = vpack.c.bf16 %v744, %v743
        %v758 = vpack.c.bf16 %v746, %v745
        %v759 = vpack.c.bf16 %v748, %v747
        %v760 = vpack.c.bf16 %v750, %v749
        %v761 = vpack.c.bf16 %v752, %v751
        %762 = vmatprep.subr.bf16.mxu0 0
        %763 = vmatpush1.bf16.xpose.msra.mxu0 %v754
        %764 = vmatprep.subr.bf16.mxu0 0
        %765 = vmatpush1.bf16.xpose.msra.mxu0 %v755
        %766 = vmatprep.subr.bf16.mxu0 0
        %767 = vmatpush1.bf16.xpose.msra.mxu0 %v756
        %768 = vmatprep.subr.bf16.mxu0 0
        %769 = vmatpush1.bf16.xpose.msra.mxu0 %v757
        %770 = vmatprep.subr.bf16.mxu0 0
        %771 = vmatpush1.bf16.xpose.msra.mxu0 %v758
        %772 = vmatprep.subr.bf16.mxu0 0
        %773 = vmatpush1.bf16.xpose.msra.mxu0 %v759
        %774 = vmatprep.subr.bf16.mxu0 0
        %775 = vmatpush1.bf16.xpose.msra.mxu0 %v760
        %776 = vmatprep.subr.bf16.mxu0 0
        %777 = vmatpush1.bf16.xpose.msra.mxu0 %v761
        %778 = vmatprep.subr.bf16.mxu0 0
        %779 = vmatpush1.bf16.xpose.msra.mxu0 0
        %780 = vmatprep.subr.bf16.mxu0 0
        %781 = vmatpush1.bf16.xpose.msra.mxu0 0
        %782 = vmatprep.subr.bf16.mxu0 0
        %783 = vmatpush1.bf16.xpose.msra.mxu0 0
        %784 = vmatprep.subr.bf16.mxu0 0
        %785 = vmatpush1.bf16.xpose.msra.mxu0 0
        %786 = vmatprep.subr.bf16.mxu0 0
        %787 = vmatpush1.bf16.xpose.msra.mxu0 0
        %788 = vmatprep.subr.bf16.mxu0 0
        %789 = vmatpush1.bf16.xpose.msra.mxu0 0
        %790 = vmatprep.subr.bf16.mxu0 0
        %791 = vmatpush1.bf16.xpose.msra.mxu0 0
        %792 = vmatprep.subr.bf16.mxu0 0
        %793 = vmatpush1.bf16.xpose.msra.mxu0 0
        %794 = vmatprep.mubr.bf16.mxu0 0
        %795 = vmatmul.mubr.bf16.gmra.mrb[0].mxu0 %v753
        %v796 = vpop.f32.mrb[0].mxu0
        %v797 = vadd.f32 0.0, %v796
        %v798 = vpop.f32.mrb[0].mxu0
        %v799 = vpop.f32.mrb[0].mxu0
        %v800 = vpop.f32.mrb[0].mxu0
        %801 = vdwg.mxu0
        %v802 = vmul.f32 %v797, 0.088388346
        %v803 = vsub.f32 %v802, 11.313708
        %v804 = vmul.f32 %v803, 1.442695
        %v805 = vpow.pop %v804
        %806 = vst [vmem:[%s302] sm:$0xf] %v805
        %v807 = vld [vmem:[#allocation3] sm:$0xf]
        %vm808 = vcmask 1043456
        %v809 = vsel %vm808, %v805, 0.0
        %810 = vadd.xlane.f32.xlu0 %v809
        %v811 = vpop.xlane.xlu0 %810
        %v812 = vadd.f32 %v807, %v811
        %vm813 = vcmask 3072
        %814 = vst.msk [vmem:[#allocation3] sm:$0xf] %vm813, %v812
        %v815 = vld [vmem:[#allocation2] sm:$0xf]
        %v816 = vpack.c.bf16 %v805, %v805
        %v817 = vpack.c.bf16 %v665, %v661
        %v818 = vpack.c.bf16 %v675, %v671
        %v819 = vpack.c.bf16 %v685, %v681
        %v820 = vpack.c.bf16 %v695, %v691
        %v821 = vpack.c.bf16 %v705, %v701
        %v822 = vpack.c.bf16 %v715, %v711
        %v823 = vpack.c.bf16 %v725, %v721
        %v824 = vpack.c.bf16 %v735, %v731
        %825 = vmatprep.subr.bf16.mxu0 0
        %826 = vmatpush1.bf16.msra.mxu0 %v817
        %827 = vmatprep.subr.bf16.mxu0 0
        %828 = vmatpush1.bf16.msra.mxu0 %v818
        %829 = vmatprep.subr.bf16.mxu0 0
        %830 = vmatpush1.bf16.msra.mxu0 %v819
        %831 = vmatprep.subr.bf16.mxu0 0
        %832 = vmatpush1.bf16.msra.mxu0 %v820
        %833 = vmatprep.subr.bf16.mxu0 0
        %834 = vmatpush1.bf16.msra.mxu0 %v821
        %835 = vmatprep.subr.bf16.mxu0 0
        %836 = vmatpush1.bf16.msra.mxu0 %v822
        %837 = vmatprep.subr.bf16.mxu0 0
        %838 = vmatpush1.bf16.msra.mxu0 %v823
        %839 = vmatprep.subr.bf16.mxu0 0
        %840 = vmatpush1.bf16.msra.mxu0 %v824
        %841 = vmatprep.subr.bf16.mxu0 0
        %842 = vmatpush1.bf16.msra.mxu0 0
        %843 = vmatprep.subr.bf16.mxu0 0
        %844 = vmatpush1.bf16.msra.mxu0 0
        %845 = vmatprep.subr.bf16.mxu0 0
        %846 = vmatpush1.bf16.msra.mxu0 0
        %847 = vmatprep.subr.bf16.mxu0 0
        %848 = vmatpush1.bf16.msra.mxu0 0
        %849 = vmatprep.subr.bf16.mxu0 0
        %850 = vmatpush1.bf16.msra.mxu0 0
        %851 = vmatprep.subr.bf16.mxu0 0
        %852 = vmatpush1.bf16.msra.mxu0 0
        %853 = vmatprep.subr.bf16.mxu0 0
        %854 = vmatpush1.bf16.msra.mxu0 0
        %855 = vmatprep.subr.bf16.mxu0 0
        %856 = vmatpush1.bf16.msra.mxu0 0
        %857 = vmatprep.mubr.bf16.mxu0 0
        %858 = vmatmul.mubr.bf16.gmra.mrb[0].mxu0 %v816
        %v859 = vpop.f32.mrb[0].mxu0
        %v860 = vadd.f32 0.0, %v859
        %v861 = vpop.f32.mrb[0].mxu0
        %v862 = vpop.f32.mrb[0].mxu0
        %v863 = vpop.f32.mrb[0].mxu0
        %864 = vdwg.mxu0
        %v865 = vadd.f32 %v815, %v860
        %vm866 = vcmask 257024
        %867 = vst.msk [vmem:[#allocation2] sm:$0xf] %vm866, %v865
        %p868 = scmp.eq.s32.totalorder %s30, 1
        // Predicated region
        $region45: #{tpu_custom_call.1} parent=39 // pred_check
          %p869 = pneg %p868
        $region46: #{tpu_custom_call.1} parent=39 // pred_check_branch
          %871 = sbr.rel (%p869) target = $region48
        $region47: #{tpu_custom_call.1} parent=39 // pred_region
          %v872 = vld [vmem:[#allocation2] sm:$0xf]
          %873 = vst.msk [vmem:[%s309] sm:$0xf] %vm866, %v872
          %v874 = vld [vmem:[#allocation3] sm:$0xf]
          %875 = vst.msk [vmem:[%s331] sm:$0xf] %vm813, %v874
        $region48: #{tpu_custom_call.1} parent=39 // pred_fallthru
          _
        %s876 = sand.u32 %s163, 1
        %s877 = scalar_lea.sflag [#allocation5], %s876
        %s878 = sand.u32 %s163, 1
        %s879 = smul.addr %s878, 4
        %s880 = scalar_lea.vmem [#allocation4], %s879
        %s881 = sand.u32 %s189, 1
        %s882 = scalar_lea.sflag [#allocation7], %s881
        %s883 = sand.u32 %s189, 1
        %s884 = smul.addr %s883, 4
        %s885 = scalar_lea.vmem [#allocation6], %s884
        %p886 = scmp.lt.s32.totalorder %s29, 1
        %s887 = scalar_select %p886, %s29, 1
        %s888 = smul.addr %s887, 4
        %s889 = scalar_lea.vmem %s7, %s888
        // Predicated region
        $region49: #{tpu_custom_call.1} parent=39 // pred_check
          %p890 = pneg %p173
        $region50: #{tpu_custom_call.1} parent=39 // pred_check_branch
          %892 = sbr.rel (%p890) target = $region52
        $region51: #{tpu_custom_call.1} parent=39 // pred_region
          %s893 = smul.u32 %s29, 2
          %s894 = sadd.s32 %s893, %s30
          %s896 = ssub.s32 64, 64
          %897 = vsyncadd %s877, %s896
          %s898 = smul.addr %s894, 64
          %s899 = scalar_lea.hbm %s5, %s898
          %s901 = sshll.u32 %s880, 4
          %s902 = int_to_ptr.vmem [resolvable:$true] %s901
          %904 = dma.vmem_to_hbm [thread:$0]  %s902, 64, %s899, %s877
        $region52: #{tpu_custom_call.1} parent=39 // pred_fallthru
          _
        // Predicated region
        $region53: #{tpu_custom_call.1} parent=39 // pred_check
          %p905 = pneg %p199
        $region54: #{tpu_custom_call.1} parent=39 // pred_check_branch
          %907 = sbr.rel (%p905) target = $region56
        $region55: #{tpu_custom_call.1} parent=39 // pred_region
          %s909 = ssub.s32 64, 64
          %910 = vsyncadd %s882, %s909
          %s911 = smul.addr %s29, 64
          %s912 = scalar_lea.hbm %s6, %s911
          %s914 = sshll.u32 %s885, 4
          %s915 = int_to_ptr.vmem [resolvable:$true] %s914
          %917 = dma.vmem_to_hbm [thread:$0]  %s915, 64, %s912, %s882
        $region56: #{tpu_custom_call.1} parent=39 // pred_fallthru
          _
        // Predicated region
        $region57: #{tpu_custom_call.1} parent=39 // pred_check
          %p918 = pneg %p225
        $region58: #{tpu_custom_call.1} parent=39 // pred_check_branch
          %920 = sbr.rel (%p918) target = $region60
        $region59: #{tpu_custom_call.1} parent=39 // pred_region
          _
        $region60: #{tpu_custom_call.1} parent=39 // pred_fallthru
          _
      $region40: #{tpu_custom_call.1} parent=5 // pred_fallthru
        _
      %p921 = scmp.le.s32.totalorder 2, %s20
      // Predicated region
      $region61: #{tpu_custom_call.1} parent=5 // pred_check
        %p922 = pneg %p921
      $region62: #{tpu_custom_call.1} parent=5 // pred_check_branch
        %924 = sbr.rel (%p922) target = $region64
      $region63: #{tpu_custom_call.1} parent=5 // pred_region
        %s925 = ssub.s32 %s20, 2
        // Predicated region
        $region65: #{tpu_custom_call.1} parent=63 // pred_check
          %p926 = pneg %p179
        $region66: #{tpu_custom_call.1} parent=63 // pred_check_branch
          %928 = sbr.rel (%p926) target = $region68
        $region67: #{tpu_custom_call.1} parent=63 // pred_region
          %s929 = sand.u32 %s164, 1
          %s930 = scalar_lea.sflag [#allocation5], %s929
          %s931 = sand.u32 %s164, 1
          %s932 = smul.addr %s931, 4
          %s933 = scalar_lea.vmem [#allocation4], %s932
          %934 = dma.done %s930, 64
        $region68: #{tpu_custom_call.1} parent=63 // pred_fallthru
          _
        // Predicated region
        $region69: #{tpu_custom_call.1} parent=63 // pred_check
          %p935 = pneg %p205
        $region70: #{tpu_custom_call.1} parent=63 // pred_check_branch
          %937 = sbr.rel (%p935) target = $region72
        $region71: #{tpu_custom_call.1} parent=63 // pred_region
          %s938 = sand.u32 %s190, 1
          %s939 = scalar_lea.sflag [#allocation7], %s938
          %s940 = sand.u32 %s190, 1
          %s941 = smul.addr %s940, 4
          %s942 = scalar_lea.vmem [#allocation6], %s941
          %943 = dma.done %s939, 64
        $region72: #{tpu_custom_call.1} parent=63 // pred_fallthru
          _
        // Predicated region
        $region73: #{tpu_custom_call.1} parent=63 // pred_check
          %p944 = pneg %p231
        $region74: #{tpu_custom_call.1} parent=63 // pred_check_branch
          %946 = sbr.rel (%p944) target = $region76
        $region75: #{tpu_custom_call.1} parent=63 // pred_region
          %p947 = scmp.lt.s32.totalorder %s31, 1
          %s948 = scalar_select %p947, %s31, 1
          %s949 = smul.addr %s948, 4
          %s950 = scalar_lea.vmem %s7, %s949
        $region76: #{tpu_custom_call.1} parent=63 // pred_fallthru
          _
      $region64: #{tpu_custom_call.1} parent=5 // pred_fallthru
        _
    $region6: #{tpu_custom_call.1} parent=1 // loop_footer
      %s24 = sadd.s32 1, %s20
    $region7: #{tpu_custom_call.1} parent=1 // loop_footer_branch
      %19 = sbr.rel target = $region3
    $region8: #{tpu_custom_call.1} parent=1 // loop_exit
      _
    %951 = vsyncpa [#allocation5], 1
    %s952 = scalar_lea.sflag [#allocation5], 1
    %953 = vsyncpa %s952, 1
    %954 = vsyncpa [#allocation7], 1
    %s955 = scalar_lea.sflag [#allocation7], 1
    %956 = vsyncpa %s955, 1

</llo_original>
